<compile_context>
chip_gen: v7x
topology: tpu7x:2x2x1
jax: 0.10.0
libtpu: 0.0.40
codegen_flags: <defaults>
</compile_context>

<pallas_src>
import functools
import math

import numpy as np
import jax
import jax.numpy as jnp
from jax.experimental import pallas as pl
from jax.experimental.pallas import tpu as pltpu

EPS_F32 = float(np.finfo(np.float32).eps)


# ----------------------------- Pallas kernel ------------------------------ #
def _fdstft_kernel(xs_ref, tap_ref, shre_ref, shim_ref, cos_ref, sin_ref,
                   out_ref, *, power, eps, n):
    # xs_ref   : (TM, N)  f32  framed signal rows (batch folded into rows)
    # tap_ref  : (TM, N)  f32  tapering window (normalized & pow'ed)
    # shre/shim: (TM, N)  f32  exp(2j*pi*idx_frac*k/N) real / imag parts
    # cos_ref  : (N,  N)  bf16 cos(2*pi*n*k/N)
    # sin_ref  : (N,  N)  bf16 sin(2*pi*n*k/N)
    # out_ref  : (TM, 3N) f32  packed [re | im | spec] (lane-dense store)
    tapered = xs_ref[...] * tap_ref[...]                 # windowing (VPU, f32)
    t_bf = tapered.astype(jnp.bfloat16)                  # bf16 MXU operands

    # DFT: X[t, k] = sum_n tapered[t, n] * exp(-2j*pi*k*n/N)  (two MXU matmuls,
    # f32 accumulation)
    x_re = jnp.dot(t_bf, cos_ref[...], preferred_element_type=jnp.float32)
    x_im = -jnp.dot(t_bf, sin_ref[...], preferred_element_type=jnp.float32)

    # fractional-shift complex multiply (kept in f32 on all generations)
    sh_re = shre_ref[...]
    sh_im = shim_ref[...]
    s_re = x_re * sh_re - x_im * sh_im
    s_im = x_re * sh_im + x_im * sh_re

    # spec = |stft + eps| ** pow   (eps added to the real part, like torch)
    re_eps = s_re + eps
    mag2 = re_eps * re_eps + s_im * s_im
    if power == 1.0:            # compile-time branch on the Python float
        spec = jnp.sqrt(mag2)
    elif power == 2.0:
        spec = mag2
    else:
        spec = mag2 ** (0.5 * power)

    # Pack the three outputs along the lane axis and store as one dense slab.
    out_ref[...] = jnp.concatenate([s_re, s_im, spec], axis=-1)


def fdstft_pallas(xs_2d, tap, sh_re, sh_im, cos_b, sin_b, power, *, tm):
    """xs_2d: (B*T_pad, N) f32; tap/sh_*: (T_pad, N) f32; cos/sin: (N, N) bf16."""
    M, N = xs_2d.shape
    T_pad = tap.shape[0]
    assert M % tm == 0 and T_pad % tm == 0
    n_tt = T_pad // tm                      # number of T-tiles per batch element

    if n_tt == 1:
        tap_map = lambda g: (0, 0)
    else:
        tap_map = lambda g: (g % n_tt, 0)   # same T-tile for every batch element

    kern = functools.partial(_fdstft_kernel, power=float(power), eps=EPS_F32, n=N)
    out = pl.pallas_call(
        kern,
        out_shape=jax.ShapeDtypeStruct((M, 3 * N), jnp.float32),
        grid=(M // tm,),
        in_specs=[
            pl.BlockSpec((tm, N), lambda g: (g, 0)),    # framed rows
            pl.BlockSpec((tm, N), tap_map),             # taper window
            pl.BlockSpec((tm, N), tap_map),             # shift real
            pl.BlockSpec((tm, N), tap_map),             # shift imag
            pl.BlockSpec((N, N), lambda g: (0, 0)),     # cos DFT matrix (bf16)
            pl.BlockSpec((N, N), lambda g: (0, 0)),     # sin DFT matrix (bf16)
        ],
        out_specs=pl.BlockSpec((tm, 3 * N), lambda g: (g, 0)),
        compiler_params=pltpu.CompilerParams(
            dimension_semantics=("parallel",),          # shards across TCs (v7x)
            vmem_limit_bytes=64 * 1024 * 1024,          # explicit cap (v7x = 64 MiB)
        ),
    )(xs_2d, tap, sh_re, sh_im, cos_b, sin_b)
    return out


# ------------------------- FDSTFT module (JAX port) ------------------------ #
class FDSTFTPallas:
    """JAX/Pallas port of FDSTFT (forward only, default hyper-parameters)."""

    def __init__(self, x, win_length, support, stride,
                 pow=1.0, win_pow=1.0, tapering_function='hann',
                 first_frame=False):
        assert tapering_function in ('hann', 'hanning')
        self.N = int(support)
        self.F = int(1 + self.N / 2)
        self.B = x.shape[0]
        self.L = x.shape[-1]
        self.pow = float(pow)
        self.first_frame = first_frame          # default False (module default)
        self.T = int(1 + (x.shape[-1] - (self.N - 1) - 1) // stride)

        self.win_min = self.N / 20
        self.win_max = self.N
        self.stride_min = 0.0
        self.stride_max = float(max(self.N, abs(stride)))

        # parameters, deterministically initialized exactly as in __init__
        self.strides = jnp.full((1,), abs(stride), dtype=jnp.float32)
        self.win_length = jnp.full((1, 1), abs(win_length), dtype=jnp.float32)
        self.win_pow = jnp.full((1, 1), abs(win_pow), dtype=jnp.float32)

    # -------- plain-JAX glue: framing indices, window, DFT/shift matrices ---
    def _prepare(self, x):
        N, T, L = self.N, self.T, self.L
        aw = jnp.clip(self.win_length, self.win_min, self.win_max)      # (1,1)
        st = jnp.clip(self.strides, self.stride_min, self.stride_max)   # (1,)

        expanded_stride = jnp.broadcast_to(st, (T,))
        # first_frame=False -> frames[0] = 0
        frames = jnp.concatenate(
            [jnp.zeros((1,), jnp.float32), jnp.cumsum(expanded_stride[1:])])

        idx_floor = jnp.floor(frames)
        idx_frac = frames - idx_floor                                    # (T,)
        idx = (idx_floor.astype(jnp.int32)[:, None]
               + jnp.arange(N, dtype=jnp.int32)[None, :])                # (T,N)
        valid = (idx >= 0) & (idx < L)
        idx_c = jnp.clip(idx, 0, L - 1)
        strided_x = jnp.where(valid[None], x[:, idx_c], 0.0)            # (B,T,N)

        # Hann window (forward direction), shape (N, T) then transposed
        base = (jnp.arange(N, dtype=jnp.float32)[:, None]
                - idx_frac[None, :])                                     # (N,T)
        tap = 0.5 - 0.5 * jnp.cos(2.0 * math.pi * (base + (aw - N + 1) / 2) / aw)
        mask1 = base >= jnp.ceil((N - 1 + aw) / 2)
        mask2 = base <= jnp.floor((N - 1 - aw) / 2)
        tap = jnp.where(mask1 | mask2, 0.0, tap)
        tap = tap / jnp.sum(tap, axis=0, keepdims=True)
        tap = tap ** self.win_pow                                        # (N,T)
        tap_tn = tap.T                                                   # (T,N)

        # real DFT matrices (FFT = matmul against exp(-2j*pi*k*n/N))
        # TODO(synk): a one-sided (N, F) DFT would halve MXU flops, but the full
        # two-sided stft is a required module output, so the full matrices are kept.
        n = jnp.arange(N, dtype=jnp.float32)
        ang = 2.0 * math.pi * jnp.outer(n, n) / N
        cos_mat = jnp.cos(ang)
        sin_mat = jnp.sin(ang)

        # fractional shift exp(+2j*pi*idx_frac*k/N)
        sh_ang = 2.0 * math.pi * idx_frac[:, None] * n[None, :] / N
        sh_re = jnp.cos(sh_ang)
        sh_im = jnp.sin(sh_ang)
        return strided_x, tap_tn, cos_mat, sin_mat, sh_re, sh_im

    def forward(self, x):
        strided_x, tap_tn, cos_m, sin_m, sh_re, sh_im = self._prepare(x)
        B, T, N = strided_x.shape

        # Row tiling: fold batch into the matmul M dimension.  Row tile is a
        # multiple of 8 sublanes; cap at 256 rows (fills the 256-row MXU on
        # v6e/v7x) while keeping padding waste small for small T.
        if T >= 256:
            tm = 256
        else:
            tm = int(-(-T // 8) * 8)
        T_pad = int(-(-T // tm) * tm)
        pad_t = T_pad - T

        xs_p = jnp.pad(strided_x, ((0, 0), (0, pad_t), (0, 0)))
        xs_2d = xs_p.reshape(B * T_pad, N)
        tap_p = jnp.pad(tap_tn, ((0, pad_t), (0, 0)))
        shre_p = jnp.pad(sh_re, ((0, pad_t), (0, 0)))
        shim_p = jnp.pad(sh_im, ((0, pad_t), (0, 0)))

        packed = fdstft_pallas(
            xs_2d, tap_p, shre_p, shim_p,
            cos_m.astype(jnp.bfloat16), sin_m.astype(jnp.bfloat16),
            self.pow, tm=tm)

        # unpack the lane-packed slab and go to PyTorch layout (B, N, T)
        packed = packed.reshape(B, T_pad, 3 * N)[:, :T]
        re_btn = packed[..., 0:N]
        im_btn = packed[..., N:2 * N]
        spec_btn = packed[..., 2 * N:2 * N + self.F]   # one-sided slice pre-transpose

        real = jnp.transpose(re_btn, (0, 2, 1))        # (B, N, T)
        imag = jnp.transpose(im_btn, (0, 2, 1))
        stft = real + 1j * imag
        spec = jnp.transpose(spec_btn, (0, 2, 1))      # (B, F, T)
        # TODO(synk): arctan2 phase kept in the JAX wrapper (Mosaic atan2
        # lowering support is not relied upon); computed only on the F slice.
        phase = jnp.arctan2(imag[:, :self.F], real[:, :self.F])
        return spec, stft, real, imag, phase


# ---------------------------------- main ----------------------------------- #
if __name__ == "__main__":
    key = jax.random.PRNGKey(0)
    B, L = 2, 256
    support, stride, win_length = 64, 16, 40.0

    x = jax.random.normal(key, (B, L), dtype=jnp.float32)
    model = FDSTFTPallas(x, win_length=win_length, support=support, stride=stride)

    spec, stft, real, imag, phase = model.forward(x)
    jax.block_until_ready((spec, stft, real, imag, phase))

    # shape checks (PyTorch conventions)
    assert spec.shape == (B, model.F, model.T)
    assert stft.shape == (B, model.N, model.T)
    assert real.shape == (B, model.N, model.T)
    assert imag.shape == (B, model.N, model.T)
    assert phase.shape == (B, model.F, model.T)

    # numerical sanity check against a plain-JAX jnp.fft reference
    sx, tap_tn, _, _, sh_re, sh_im = model._prepare(x)
    spectr = jnp.fft.fft(sx * tap_tn[None])
    stft_ref = jnp.transpose(spectr * (sh_re + 1j * sh_im)[None], (0, 2, 1))
    assert np.allclose(np.asarray(real), np.real(np.asarray(stft_ref)),
                       atol=2e-2, rtol=2e-2)
    assert np.allclose(np.asarray(imag), np.imag(np.asarray(stft_ref)),
                       atol=2e-2, rtol=2e-2)
    spec_ref = (jnp.abs(stft_ref + EPS_F32) ** model.pow)[:, :model.F]
    assert np.allclose(np.asarray(spec), np.asarray(spec_ref),
                       atol=2e-2, rtol=2e-2)

    print("KERNEL_OK")
</pallas_src>

<mosaic_0001>
module attributes {stable_mosaic.version = 11 : i64} {
  func.func @_fdstft_kernel(%arg0: i32, %arg1: memref<16x64xf32, #tpu.memory_space<vmem>>, %arg2: memref<16x64xf32, #tpu.memory_space<vmem>>, %arg3: memref<16x64xf32, #tpu.memory_space<vmem>>, %arg4: memref<16x64xf32, #tpu.memory_space<vmem>>, %arg5: memref<64x64xbf16, #tpu.memory_space<vmem>>, %arg6: memref<64x64xbf16, #tpu.memory_space<vmem>>, %arg7: memref<16x192xf32, #tpu.memory_space<vmem>>) attributes {dimension_semantics = [#tpu.dimension_semantics<parallel>], iteration_bounds = array<i64: 2>, scalar_prefetch = 0 : i64, scratch_operands = 0 : i64, tpu.core_type = #tpu.core_type<tc>, window_params = [{transform_indices = @transform_0, window_bounds = array<i64: 16, 64>}, {pipeline_mode = #tpu.pipeline_mode<synchronous>, transform_indices = @transform_1, window_bounds = array<i64: 16, 64>}, {pipeline_mode = #tpu.pipeline_mode<synchronous>, transform_indices = @transform_2, window_bounds = array<i64: 16, 64>}, {pipeline_mode = #tpu.pipeline_mode<synchronous>, transform_indices = @transform_3, window_bounds = array<i64: 16, 64>}, {pipeline_mode = #tpu.pipeline_mode<synchronous>, transform_indices = @transform_4, window_bounds = array<i64: 64, 64>}, {pipeline_mode = #tpu.pipeline_mode<synchronous>, transform_indices = @transform_5, window_bounds = array<i64: 64, 64>}, {transform_indices = @transform_6, window_bounds = array<i64: 16, 192>}]} {
    %c0 = arith.constant 0 : index
    %c0_0 = arith.constant 0 : index
    %0 = vector.load %arg1[%c0, %c0_0] : memref<16x64xf32, #tpu.memory_space<vmem>>, vector<16x64xf32>
    %c0_1 = arith.constant 0 : index
    %c0_2 = arith.constant 0 : index
    %1 = vector.load %arg2[%c0_1, %c0_2] : memref<16x64xf32, #tpu.memory_space<vmem>>, vector<16x64xf32>
    %2 = arith.mulf %0, %1 : vector<16x64xf32>
    %3 = arith.truncf %2 : vector<16x64xf32> to vector<16x64xbf16>
    %c0_3 = arith.constant 0 : index
    %c0_4 = arith.constant 0 : index
    %4 = vector.load %arg5[%c0_3, %c0_4] : memref<64x64xbf16, #tpu.memory_space<vmem>>, vector<64x64xbf16>
    %cst = arith.constant dense<0.000000e+00> : vector<16x64xf32>
    %5 = tpu.matmul %3, %4, %cst {dimension_numbers = #tpu.dot_dimension_numbers<[1], [0], [0], [1], [0, 0, 1, 1], [], []>} : vector<16x64xbf16>, vector<64x64xbf16>, vector<16x64xf32> -> vector<16x64xf32>
    %c0_5 = arith.constant 0 : index
    %c0_6 = arith.constant 0 : index
    %6 = vector.load %arg6[%c0_5, %c0_6] : memref<64x64xbf16, #tpu.memory_space<vmem>>, vector<64x64xbf16>
    %cst_7 = arith.constant dense<0.000000e+00> : vector<16x64xf32>
    %7 = tpu.matmul %3, %6, %cst_7 {dimension_numbers = #tpu.dot_dimension_numbers<[1], [0], [0], [1], [0, 0, 1, 1], [], []>} : vector<16x64xbf16>, vector<64x64xbf16>, vector<16x64xf32> -> vector<16x64xf32>
    %cst_8 = arith.constant 0.000000e+00 : f32
    %8 = vector.broadcast %cst_8 : f32 to vector<16x64xf32>
    %9 = arith.subf %8, %7 : vector<16x64xf32>
    %c0_9 = arith.constant 0 : index
    %c0_10 = arith.constant 0 : index
    %10 = vector.load %arg3[%c0_9, %c0_10] : memref<16x64xf32, #tpu.memory_space<vmem>>, vector<16x64xf32>
    %c0_11 = arith.constant 0 : index
    %c0_12 = arith.constant 0 : index
    %11 = vector.load %arg4[%c0_11, %c0_12] : memref<16x64xf32, #tpu.memory_space<vmem>>, vector<16x64xf32>
    %12 = arith.mulf %5, %10 : vector<16x64xf32>
    %13 = arith.mulf %9, %11 : vector<16x64xf32>
    %14 = arith.subf %12, %13 : vector<16x64xf32>
    %15 = arith.mulf %5, %11 : vector<16x64xf32>
    %16 = arith.mulf %9, %10 : vector<16x64xf32>
    %17 = arith.addf %15, %16 : vector<16x64xf32>
    %cst_13 = arith.constant 1.1920929E-7 : f32
    %18 = vector.broadcast %cst_13 : f32 to vector<16x64xf32>
    %19 = arith.addf %14, %18 : vector<16x64xf32>
    %20 = arith.mulf %19, %19 : vector<16x64xf32>
    %21 = arith.mulf %17, %17 : vector<16x64xf32>
    %22 = arith.addf %20, %21 : vector<16x64xf32>
    %23 = math.sqrt %22 : vector<16x64xf32>
    %24 = tpu.concatenate %14, %17, %23 in 1 : vector<16x64xf32>, vector<16x64xf32>, vector<16x64xf32> -> vector<16x192xf32>
    %c0_14 = arith.constant 0 : index
    %c0_15 = arith.constant 0 : index
    %25 = vector.load %arg7[%c0_14, %c0_15] : memref<16x192xf32, #tpu.memory_space<vmem>>, vector<16x192xf32>
    tpu.vector_store %arg7[%c0_14, %c0_15], %24 {strides = array<i32>} : memref<16x192xf32, #tpu.memory_space<vmem>>, vector<16x192xf32>,
    return
  }
  func.func @transform_0(%arg0: i32) -> (i32, i32) {
    %c0_i32 = arith.constant 0 : i32
    %c0_i32_0 = arith.constant 0 : i32
    return %arg0, %c0_i32 : i32, i32
  }
  func.func @transform_1(%arg0: i32) -> (i32, i32) {
    %c0_i32 = arith.constant 0 : i32
    %c0_i32_0 = arith.constant 0 : i32
    %c0_i32_1 = arith.constant 0 : i32
    return %c0_i32, %c0_i32_0 : i32, i32
  }
  func.func @transform_2(%arg0: i32) -> (i32, i32) {
    %c0_i32 = arith.constant 0 : i32
    %c0_i32_0 = arith.constant 0 : i32
    %c0_i32_1 = arith.constant 0 : i32
    return %c0_i32, %c0_i32_0 : i32, i32
  }
  func.func @transform_3(%arg0: i32) -> (i32, i32) {
    %c0_i32 = arith.constant 0 : i32
    %c0_i32_0 = arith.constant 0 : i32
    %c0_i32_1 = arith.constant 0 : i32
    return %c0_i32, %c0_i32_0 : i32, i32
  }
  func.func @transform_4(%arg0: i32) -> (i32, i32) {
    %c0_i32 = arith.constant 0 : i32
    %c0_i32_0 = arith.constant 0 : i32
    %c0_i32_1 = arith.constant 0 : i32
    return %c0_i32, %c0_i32_0 : i32, i32
  }
  func.func @transform_5(%arg0: i32) -> (i32, i32) {
    %c0_i32 = arith.constant 0 : i32
    %c0_i32_0 = arith.constant 0 : i32
    %c0_i32_1 = arith.constant 0 : i32
    return %c0_i32, %c0_i32_0 : i32, i32
  }
  func.func @transform_6(%arg0: i32) -> (i32, i32) {
    %c0_i32 = arith.constant 0 : i32
    %c0_i32_0 = arith.constant 0 : i32
    return %arg0, %c0_i32 : i32, i32
  }
}

</mosaic_0001>

<llo_original>
// kernel: tpu_custom_call.1
$region0: #{tpu_custom_call.1}
  #allocation0 [shape = 'u32[]', space=smem, size = 0x4, offset = 0x4, fixed_abs, tag = 'smem constant byte address 0x4 - core index']
  #allocation1 [shape = 'u32[144,128]{1,0:T(1,128)}', space=vmem, size = 0x12000, scoped, tag = 'internal scratch']
  %s0 = inlined_call_operand.hbm [shape: f32[32,64], index: 0, kind: input, shape index: {}]
  %s1 = inlined_call_operand.hbm [shape: f32[16,64], index: 1, kind: input, shape index: {}]
  %s2 = inlined_call_operand.hbm [shape: f32[16,64], index: 2, kind: input, shape index: {}]
  %s3 = inlined_call_operand.hbm [shape: f32[16,64], index: 3, kind: input, shape index: {}]
  %s4 = inlined_call_operand.hbm [shape: bf16[64,64], index: 4, kind: input, shape index: {}]
  %s5 = inlined_call_operand.hbm [shape: bf16[64,64], index: 5, kind: input, shape index: {}]
  %s6 = inlined_call_operand.hbm [shape: f32[32,192], index: 6, kind: output, shape index: {}]
  %s7 = sld [smem:[#allocation0]]
  $region81: #{tpu_custom_call.1} parent=0
    _
  %s9 = ssub.s32 1, %s7
  %s10 = scalar_select 0, %s9, %s7
  $region1: #{tpu_custom_call.1} parent=0
    #allocation2 [shape = 'u8[16384]{0}', space=vmem, size = 0x4000, scoped, tag = 'input window, operand 0']
    #allocation3 [shape = 's32[2]{0}', space=sflag, size = 0x8, scoped, tag = 'scoped memory for tpu_custom_call.1']
    #allocation4 [shape = 's32[2]{0}', space=sflag, size = 0x8, scoped, tag = 'scoped memory for tpu_custom_call.1']
    #allocation5 [shape = 'u8[8192]{0}', space=vmem, size = 0x2000, scoped, tag = 'input window, operand 1, single buffered']
    #allocation6 [shape = 's32[1]{0}', space=sflag, size = 0x4, scoped, tag = 'scoped memory for tpu_custom_call.1']
    #allocation7 [shape = 'u8[8192]{0}', space=vmem, size = 0x2000, scoped, tag = 'input window, operand 2, single buffered']
    #allocation8 [shape = 'u8[8192]{0}', space=vmem, size = 0x2000, scoped, tag = 'input window, operand 3, single buffered']
    #allocation9 [shape = 's32[1]{0}', space=sflag, size = 0x4, scoped, tag = 'scoped memory for tpu_custom_call.1']
    #allocation10 [shape = 'u8[16384]{0}', space=vmem, size = 0x4000, scoped, tag = 'input window, operand 4, single buffered']
    #allocation11 [shape = 'u8[16384]{0}', space=vmem, size = 0x4000, scoped, tag = 'input window, operand 5, single buffered']
    #allocation12 [shape = 's32[1]{0}', space=sflag, size = 0x4, scoped, tag = 'scoped memory for tpu_custom_call.1']
    #allocation13 [shape = 'u8[32768]{0}', space=vmem, size = 0x8000, scoped, tag = 'output window, operand 0']
    %11 = vsyncpa [#allocation3], 0
    %s12 = scalar_lea.sflag [#allocation3], 1
    %13 = vsyncpa %s12, 0
    %14 = vsyncpa [#allocation6], 0
    %15 = vsyncpa [#allocation9], 0
    %16 = vsyncpa [#allocation12], 0
    %17 = vsyncpa [#allocation4], 0
    %s18 = scalar_lea.sflag [#allocation4], 1
    %19 = vsyncpa %s18, 0
    loop: start=0, step=1, limit=4
    $region2: #{tpu_custom_call.1} parent=1 // loop_pre_header
      _
    $region3: #{tpu_custom_call.1} parent=1 // loop_header
      %s21 = sphi 0, %s25
      %p22 = scmp.ge.s32.totalorder %s21, 4
      %s31 = sphi 0, %s33
      %s34 = sphi 0, %s31
      %s35 = sphi 0, %s34
      %s51 = sphi 0, %s35
      %s55 = sphi 0, %s55
      %s57 = sphi 0, %s55
      %s58 = sphi 0, %s57
      %s72 = sphi 0, %s58
      %s76 = sphi 0, %s76
      %s78 = sphi 0, %s76
      %s79 = sphi 0, %s78
      %s93 = sphi 0, %s79
      %s97 = sphi 0, %s97
      %s99 = sphi 0, %s97
      %s100 = sphi 0, %s99
      %s114 = sphi 0, %s100
      %s118 = sphi 0, %s118
      %s120 = sphi 0, %s118
      %s121 = sphi 0, %s120
      %s135 = sphi 0, %s121
      %s139 = sphi 0, %s139
      %s141 = sphi 0, %s139
      %s142 = sphi 0, %s141
      %s156 = sphi 0, %s142
      %s162 = sphi 0, %s164
      %s165 = sphi 0, %s162
      %s166 = sphi 0, %s165
      %s182 = sphi 0, %s166
    $region4: #{tpu_custom_call.1} parent=1 // loop_header_branch
      %24 = sbr.rel (%p22) target = $region8
    $region5: #{tpu_custom_call.1} parent=1 // loop_body
      %s26 = ssub.s32 %s21, 1
      %s27 = ssub.s32 %s21, 2
      %s28 = sadd.s32 %s21, 1
      %s29 = ssub.s32 %s21, %s28
      %p30 = scmp.eq.s32.totalorder %s29, 0
      %s32 = sadd.s32 %s31, 1
      %s33 = scalar_select %p30, %s31, %s32
      %p36 = pneg %p30
      %p37 = scmp.eq.s32.totalorder %s21, 1
      %p38 = por %p36, %p37
      %p39 = scmp.ne.s32.totalorder %s31, %s34
      %p40 = scmp.eq.s32.totalorder %s21, 0
      %p41 = por %p39, %p40
      %p42 = scmp.ne.s32.totalorder %s31, %s34
      %p43 = scmp.eq.s32.totalorder %s26, 1
      %p44 = por %p42, %p43
      %p45 = scmp.ne.s32.totalorder %s34, %s35
      %p46 = scmp.eq.s32.totalorder %s26, 0
      %p47 = por %p45, %p46
      %p48 = scmp.ne.s32.totalorder %s34, %s35
      %p49 = scmp.eq.s32.totalorder %s27, 1
      %p50 = por %p48, %p49
      %p52 = scmp.ne.s32.totalorder %s35, %s51
      %p53 = scmp.eq.s32.totalorder %s27, 0
      %p54 = por %p52, %p53
      %s56 = sadd.s32 %s55, 1
      %p59 = scmp.eq.s32.totalorder %s21, 1
      %p60 = scmp.ne.s32.totalorder %s55, %s57
      %p61 = scmp.eq.s32.totalorder %s21, 0
      %p62 = por %p60, %p61
      %p63 = scmp.ne.s32.totalorder %s55, %s57
      %p64 = scmp.eq.s32.totalorder %s26, 1
      %p65 = por %p63, %p64
      %p66 = scmp.ne.s32.totalorder %s57, %s58
      %p67 = scmp.eq.s32.totalorder %s26, 0
      %p68 = por %p66, %p67
      %p69 = scmp.ne.s32.totalorder %s57, %s58
      %p70 = scmp.eq.s32.totalorder %s27, 1
      %p71 = por %p69, %p70
      %p73 = scmp.ne.s32.totalorder %s58, %s72
      %p74 = scmp.eq.s32.totalorder %s27, 0
      %p75 = por %p73, %p74
      %s77 = sadd.s32 %s76, 1
      %p80 = scmp.eq.s32.totalorder %s21, 1
      %p81 = scmp.ne.s32.totalorder %s76, %s78
      %p82 = scmp.eq.s32.totalorder %s21, 0
      %p83 = por %p81, %p82
      %p84 = scmp.ne.s32.totalorder %s76, %s78
      %p85 = scmp.eq.s32.totalorder %s26, 1
      %p86 = por %p84, %p85
      %p87 = scmp.ne.s32.totalorder %s78, %s79
      %p88 = scmp.eq.s32.totalorder %s26, 0
      %p89 = por %p87, %p88
      %p90 = scmp.ne.s32.totalorder %s78, %s79
      %p91 = scmp.eq.s32.totalorder %s27, 1
      %p92 = por %p90, %p91
      %p94 = scmp.ne.s32.totalorder %s79, %s93
      %p95 = scmp.eq.s32.totalorder %s27, 0
      %p96 = por %p94, %p95
      %s98 = sadd.s32 %s97, 1
      %p101 = scmp.eq.s32.totalorder %s21, 1
      %p102 = scmp.ne.s32.totalorder %s97, %s99
      %p103 = scmp.eq.s32.totalorder %s21, 0
      %p104 = por %p102, %p103
      %p105 = scmp.ne.s32.totalorder %s97, %s99
      %p106 = scmp.eq.s32.totalorder %s26, 1
      %p107 = por %p105, %p106
      %p108 = scmp.ne.s32.totalorder %s99, %s100
      %p109 = scmp.eq.s32.totalorder %s26, 0
      %p110 = por %p108, %p109
      %p111 = scmp.ne.s32.totalorder %s99, %s100
      %p112 = scmp.eq.s32.totalorder %s27, 1
      %p113 = por %p111, %p112
      %p115 = scmp.ne.s32.totalorder %s100, %s114
      %p116 = scmp.eq.s32.totalorder %s27, 0
      %p117 = por %p115, %p116
      %s119 = sadd.s32 %s118, 1
      %p122 = scmp.eq.s32.totalorder %s21, 1
      %p123 = scmp.ne.s32.totalorder %s118, %s120
      %p124 = scmp.eq.s32.totalorder %s21, 0
      %p125 = por %p123, %p124
      %p126 = scmp.ne.s32.totalorder %s118, %s120
      %p127 = scmp.eq.s32.totalorder %s26, 1
      %p128 = por %p126, %p127
      %p129 = scmp.ne.s32.totalorder %s120, %s121
      %p130 = scmp.eq.s32.totalorder %s26, 0
      %p131 = por %p129, %p130
      %p132 = scmp.ne.s32.totalorder %s120, %s121
      %p133 = scmp.eq.s32.totalorder %s27, 1
      %p134 = por %p132, %p133
      %p136 = scmp.ne.s32.totalorder %s121, %s135
      %p137 = scmp.eq.s32.totalorder %s27, 0
      %p138 = por %p136, %p137
      %s140 = sadd.s32 %s139, 1
      %p143 = scmp.eq.s32.totalorder %s21, 1
      %p144 = scmp.ne.s32.totalorder %s139, %s141
      %p145 = scmp.eq.s32.totalorder %s21, 0
      %p146 = por %p144, %p145
      %p147 = scmp.ne.s32.totalorder %s139, %s141
      %p148 = scmp.eq.s32.totalorder %s26, 1
      %p149 = por %p147, %p148
      %p150 = scmp.ne.s32.totalorder %s141, %s142
      %p151 = scmp.eq.s32.totalorder %s26, 0
      %p152 = por %p150, %p151
      %p153 = scmp.ne.s32.totalorder %s141, %s142
      %p154 = scmp.eq.s32.totalorder %s27, 1
      %p155 = por %p153, %p154
      %p157 = scmp.ne.s32.totalorder %s142, %s156
      %p158 = scmp.eq.s32.totalorder %s27, 0
      %p159 = por %p157, %p158
      %s160 = ssub.s32 %s21, %s28
      %p161 = scmp.eq.s32.totalorder %s160, 0
      %s163 = sadd.s32 %s162, 1
      %s164 = scalar_select %p161, %s162, %s163
      %p167 = pneg %p161
      %p168 = scmp.eq.s32.totalorder %s21, 1
      %p169 = por %p167, %p168
      %p170 = scmp.ne.s32.totalorder %s162, %s165
      %p171 = scmp.eq.s32.totalorder %s21, 0
      %p172 = por %p170, %p171
      %p173 = scmp.ne.s32.totalorder %s162, %s165
      %p174 = scmp.eq.s32.totalorder %s26, 1
      %p175 = por %p173, %p174
      %p176 = scmp.ne.s32.totalorder %s165, %s166
      %p177 = scmp.eq.s32.totalorder %s26, 0
      %p178 = por %p176, %p177
      %p179 = scmp.ne.s32.totalorder %s165, %s166
      %p180 = scmp.eq.s32.totalorder %s27, 1
      %p181 = por %p179, %p180
      %p183 = scmp.ne.s32.totalorder %s166, %s182
      %p184 = scmp.eq.s32.totalorder %s27, 0
      %p185 = por %p183, %p184
      %p186 = scmp.le.s32.totalorder 1, %s21
      %p187 = scmp.lt.s32.totalorder %s21, 3
      %p188 = pnand %p186, %p187
      %p189 = pneg %p188
      // Predicated region
      $region9: #{tpu_custom_call.1} parent=5 // pred_check
        _
      $region10: #{tpu_custom_call.1} parent=5 // pred_check_branch
        %191 = sbr.rel (%p188) target = $region12
      $region11: #{tpu_custom_call.1} parent=5 // pred_region
        %s192 = ssub.s32 %s21, 1
        // Predicated region
        $region13: #{tpu_custom_call.1} parent=11 // pred_check
          %p193 = pneg %p68
        $region14: #{tpu_custom_call.1} parent=11 // pred_check_branch
          %195 = sbr.rel (%p193) target = $region16
        $region15: #{tpu_custom_call.1} parent=11 // pred_region
          %s197 = ssub.s32 256, 256
          %198 = vsyncadd [#allocation6], %s197
          %s199 = sshll.u32 [#allocation5], 4
          %s200 = int_to_ptr.vmem [resolvable:$true] %s199
          %205 = dma.hbm_to_vmem [thread:$0]  %s1, 256, %s200, [#allocation6], 128, 128, 8
        $region16: #{tpu_custom_call.1} parent=11 // pred_fallthru
          _
        // Predicated region
        $region17: #{tpu_custom_call.1} parent=11 // pred_check
          %p206 = pneg %p89
        $region18: #{tpu_custom_call.1} parent=11 // pred_check_branch
          %208 = sbr.rel (%p206) target = $region20
        $region19: #{tpu_custom_call.1} parent=11 // pred_region
          %s210 = ssub.s32 256, 256
          %211 = vsyncadd [#allocation6], %s210
          %s212 = sshll.u32 [#allocation7], 4
          %s213 = int_to_ptr.vmem [resolvable:$true] %s212
          %218 = dma.hbm_to_vmem [thread:$0]  %s2, 256, %s213, [#allocation6], 128, 128, 8
        $region20: #{tpu_custom_call.1} parent=11 // pred_fallthru
          _
        // Predicated region
        $region21: #{tpu_custom_call.1} parent=11 // pred_check
          %p219 = pneg %p110
        $region22: #{tpu_custom_call.1} parent=11 // pred_check_branch
          %221 = sbr.rel (%p219) target = $region24
        $region23: #{tpu_custom_call.1} parent=11 // pred_region
          %s223 = ssub.s32 256, 256
          %224 = vsyncadd [#allocation9], %s223
          %s225 = sshll.u32 [#allocation8], 4
          %s226 = int_to_ptr.vmem [resolvable:$true] %s225
          %231 = dma.hbm_to_vmem [thread:$0]  %s3, 256, %s226, [#allocation9], 128, 128, 8
        $region24: #{tpu_custom_call.1} parent=11 // pred_fallthru
          _
        // Predicated region
        $region25: #{tpu_custom_call.1} parent=11 // pred_check
          %p232 = pneg %p131
        $region26: #{tpu_custom_call.1} parent=11 // pred_check_branch
          %234 = sbr.rel (%p232) target = $region28
        $region27: #{tpu_custom_call.1} parent=11 // pred_region
          %s236 = ssub.s32 512, 512
          %237 = vsyncadd [#allocation9], %s236
          %s238 = sshll.u32 [#allocation10], 4
          %s239 = int_to_ptr.vmem [resolvable:$true] %s238
          %244 = dma.hbm_to_vmem [thread:$0]  %s4, 512, %s239, [#allocation9], 64, 64, 4
        $region28: #{tpu_custom_call.1} parent=11 // pred_fallthru
          _
        // Predicated region
        $region29: #{tpu_custom_call.1} parent=11 // pred_check
          %p245 = pneg %p152
        $region30: #{tpu_custom_call.1} parent=11 // pred_check_branch
          %247 = sbr.rel (%p245) target = $region32
        $region31: #{tpu_custom_call.1} parent=11 // pred_region
          %s249 = ssub.s32 512, 512
          %250 = vsyncadd [#allocation12], %s249
          %s251 = sshll.u32 [#allocation11], 4
          %s252 = int_to_ptr.vmem [resolvable:$true] %s251
          %257 = dma.hbm_to_vmem [thread:$0]  %s5, 512, %s252, [#allocation12], 64, 64, 4
        $region32: #{tpu_custom_call.1} parent=11 // pred_fallthru
          _
      $region12: #{tpu_custom_call.1} parent=5 // pred_fallthru
        _
      %p258 = scmp.lt.s32.totalorder %s21, 2
      // Predicated region
      $region33: #{tpu_custom_call.1} parent=5 // pred_check
        %p259 = pneg %p258
      $region34: #{tpu_custom_call.1} parent=5 // pred_check_branch
        %261 = sbr.rel (%p259) target = $region36
      $region35: #{tpu_custom_call.1} parent=5 // pred_region
        // Predicated region
        $region37: #{tpu_custom_call.1} parent=35 // pred_check
          %p262 = pneg %p41
        $region38: #{tpu_custom_call.1} parent=35 // pred_check_branch
          %264 = sbr.rel (%p262) target = $region40
        $region39: #{tpu_custom_call.1} parent=35 // pred_region
          %s265 = sand.u32 %s31, 1
          %s266 = scalar_lea.sflag [#allocation3], %s265
          %s267 = sand.u32 %s31, 1
          %s268 = smul.addr %s267, 16
          %s269 = scalar_lea.vmem [#allocation2], %s268
          %s270 = smul.u32 2, %s21
          %s272 = ssub.s32 256, 256
          %273 = vsyncadd %s266, %s272
          %s274 = smul.addr %s270, 128
          %s275 = scalar_lea.hbm %s0, %s274
          %s276 = sshll.u32 %s269, 4
          %s277 = int_to_ptr.vmem [resolvable:$true] %s276
          %282 = dma.hbm_to_vmem [thread:$0]  %s275, 256, %s277, %s266, 128, 128, 8
        $region40: #{tpu_custom_call.1} parent=35 // pred_fallthru
          _
      $region36: #{tpu_custom_call.1} parent=5 // pred_fallthru
        _
      %p283 = scmp.le.s32.totalorder 1, %s21
      %p284 = scmp.lt.s32.totalorder %s21, 3
      %p285 = pnand %p283, %p284
      %p286 = pneg %p285
      // Predicated region
      $region41: #{tpu_custom_call.1} parent=5 // pred_check
        _
      $region42: #{tpu_custom_call.1} parent=5 // pred_check_branch
        %288 = sbr.rel (%p285) target = $region44
      $region43: #{tpu_custom_call.1} parent=5 // pred_region
        %s289 = ssub.s32 %s21, 1
        %s290 = sand.u32 %s34, 1
        %s291 = scalar_lea.sflag [#allocation3], %s290
        %s292 = sand.u32 %s34, 1
        %s293 = smul.addr %s292, 16
        %s294 = scalar_lea.vmem [#allocation2], %s293
        // Predicated region
        $region45: #{tpu_custom_call.1} parent=43 // pred_check
          %p295 = pneg %p47
        $region46: #{tpu_custom_call.1} parent=43 // pred_check_branch
          %297 = sbr.rel (%p295) target = $region48
        $region47: #{tpu_custom_call.1} parent=43 // pred_region
          %298 = dma.done %s291, 256
        $region48: #{tpu_custom_call.1} parent=43 // pred_fallthru
          _
        // Predicated region
        $region49: #{tpu_custom_call.1} parent=43 // pred_check
          %p299 = pneg %p68
        $region50: #{tpu_custom_call.1} parent=43 // pred_check_branch
          %301 = sbr.rel (%p299) target = $region52
        $region51: #{tpu_custom_call.1} parent=43 // pred_region
          %302 = dma.done [#allocation6], 256
        $region52: #{tpu_custom_call.1} parent=43 // pred_fallthru
          _
        // Predicated region
        $region53: #{tpu_custom_call.1} parent=43 // pred_check
          %p303 = pneg %p89
        $region54: #{tpu_custom_call.1} parent=43 // pred_check_branch
          %305 = sbr.rel (%p303) target = $region56
        $region55: #{tpu_custom_call.1} parent=43 // pred_region
          %306 = dma.done [#allocation6], 256
        $region56: #{tpu_custom_call.1} parent=43 // pred_fallthru
          _
        // Predicated region
        $region57: #{tpu_custom_call.1} parent=43 // pred_check
          %p307 = pneg %p110
        $region58: #{tpu_custom_call.1} parent=43 // pred_check_branch
          %309 = sbr.rel (%p307) target = $region60
        $region59: #{tpu_custom_call.1} parent=43 // pred_region
          %310 = dma.done [#allocation9], 256
        $region60: #{tpu_custom_call.1} parent=43 // pred_fallthru
          _
        // Predicated region
        $region61: #{tpu_custom_call.1} parent=43 // pred_check
          %p311 = pneg %p131
        $region62: #{tpu_custom_call.1} parent=43 // pred_check_branch
          %313 = sbr.rel (%p311) target = $region64
        $region63: #{tpu_custom_call.1} parent=43 // pred_region
          %314 = dma.done [#allocation9], 512
        $region64: #{tpu_custom_call.1} parent=43 // pred_fallthru
          _
        // Predicated region
        $region65: #{tpu_custom_call.1} parent=43 // pred_check
          %p315 = pneg %p152
        $region66: #{tpu_custom_call.1} parent=43 // pred_check_branch
          %317 = sbr.rel (%p315) target = $region68
        $region67: #{tpu_custom_call.1} parent=43 // pred_region
          %318 = dma.done [#allocation12], 512
        $region68: #{tpu_custom_call.1} parent=43 // pred_fallthru
          _
        %s319 = sand.u32 %s34, 1
        %s320 = scalar_lea.sflag [#allocation3], %s319
        %s321 = sand.u32 %s34, 1
        %s322 = smul.addr %s321, 16
        %s323 = scalar_lea.vmem [#allocation2], %s322
        %p324 = pneg %p47
        %p325 = pneg %p44
        %p326 = pneg %p68
        %p327 = pneg %p65
        %p328 = pneg %p89
        %p329 = pneg %p86
        %p330 = pneg %p110
        %p331 = pneg %p107
        %p332 = pneg %p131
        %p333 = pneg %p128
        %p334 = pneg %p152
        %p335 = pneg %p149
        %p336 = pneg %p178
        %p337 = pneg %p175
        %s338 = sand.u32 %s165, 1
        %s339 = scalar_lea.sflag [#allocation4], %s338
        %s340 = sand.u32 %s165, 1
        %s341 = smul.addr %s340, 32
        %s342 = scalar_lea.vmem [#allocation13], %s341
        %s343 = smul.u32 2, %s26
        %s344 = smul.u32 2, %s26
        %v346 = vld [vmem:[%s294] sm:$0xff]
        %v347 = vld [vmem:[%s294 + $0x8] sm:$0xff]
        %v348 = vld [vmem:[#allocation5] sm:$0xff]
        %v349 = vld [vmem:[#allocation5 + $0x8] sm:$0xff]
        %v350 = vmul.f32 %v346, %v348
        %v351 = vmul.f32 %v347, %v349
        %v352 = vpack.c.bf16 %v351, %v350
        %v353 = vld [vmem:[#allocation10] sm:$0xf]
        %v354 = vld [vmem:[#allocation10 + $0x4] sm:$0xf]
        %v355 = vld [vmem:[#allocation10 + $0x8] sm:$0xf]
        %v356 = vld [vmem:[#allocation10 + $0xc] sm:$0xf]
        %v357 = vld [vmem:[#allocation10 + $0x10] sm:$0xf]
        %v358 = vld [vmem:[#allocation10 + $0x14] sm:$0xf]
        %v359 = vld [vmem:[#allocation10 + $0x18] sm:$0xf]
        %v360 = vld [vmem:[#allocation10 + $0x1c] sm:$0xf]
        %v369 = vunpack.c.l.b16 %v353
        %v370 = vunpack.c.l.b16 %v354
        %v371 = vunpack.c.l.b16 %v355
        %v372 = vunpack.c.l.b16 %v356
        %v373 = vunpack.c.l.b16 %v357
        %v374 = vunpack.c.l.b16 %v358
        %v375 = vunpack.c.l.b16 %v359
        %v376 = vunpack.c.l.b16 %v360
        %v377 = vpack.c.b16 %v370, %v369
        %v378 = vpack.c.b16 %v372, %v371
        %v379 = vpack.c.b16 %v374, %v373
        %v380 = vpack.c.b16 %v376, %v375
        %vm385 = vcmask 523264
        %v387 = vsel %vm385, %v352, 0
        %389 = vmatprep.subr.bf16.mxu0 0
        %390 = vmatpush1.bf16.msra.mxu0 %v377
        %391 = vmatprep.subr.bf16.mxu0 0
        %392 = vmatpush1.bf16.msra.mxu0 %v378
        %393 = vmatprep.subr.bf16.mxu0 0
        %394 = vmatpush1.bf16.msra.mxu0 %v379
        %395 = vmatprep.subr.bf16.mxu0 0
        %396 = vmatpush1.bf16.msra.mxu0 %v380
        %397 = vmatprep.subr.bf16.mxu0 0
        %398 = vmatpush1.bf16.msra.mxu0 0
        %399 = vmatprep.subr.bf16.mxu0 0
        %400 = vmatpush1.bf16.msra.mxu0 0
        %401 = vmatprep.subr.bf16.mxu0 0
        %402 = vmatpush1.bf16.msra.mxu0 0
        %403 = vmatprep.subr.bf16.mxu0 0
        %404 = vmatpush1.bf16.msra.mxu0 0
        %405 = vmatprep.subr.bf16.mxu0 0
        %406 = vmatpush1.bf16.msra.mxu0 0
        %407 = vmatprep.subr.bf16.mxu0 0
        %408 = vmatpush1.bf16.msra.mxu0 0
        %409 = vmatprep.subr.bf16.mxu0 0
        %410 = vmatpush1.bf16.msra.mxu0 0
        %411 = vmatprep.subr.bf16.mxu0 0
        %412 = vmatpush1.bf16.msra.mxu0 0
        %413 = vmatprep.subr.bf16.mxu0 0
        %414 = vmatpush1.bf16.msra.mxu0 0
        %415 = vmatprep.subr.bf16.mxu0 0
        %416 = vmatpush1.bf16.msra.mxu0 0
        %417 = vmatprep.subr.bf16.mxu0 0
        %418 = vmatpush1.bf16.msra.mxu0 0
        %419 = vmatprep.subr.bf16.mxu0 0
        %420 = vmatpush1.bf16.msra.mxu0 0
        %421 = vmatprep.mubr.bf16.mxu0 0
        %422 = vmatmul.mubr.bf16.gmra.mrb[0].mxu0 %v387
        %v423 = vpop.f32.mrb[0].mxu0
        %v424 = vadd.f32 0.0, %v423
        %v425 = vpop.f32.mrb[0].mxu0
        %v426 = vpop.f32.mrb[0].mxu0
        %v427 = vadd.f32 0.0, %v426
        %v428 = vpop.f32.mrb[0].mxu0
        %429 = vdwg.mxu0
        %v430 = vld [vmem:[#allocation11] sm:$0xf]
        %v431 = vld [vmem:[#allocation11 + $0x4] sm:$0xf]
        %v432 = vld [vmem:[#allocation11 + $0x8] sm:$0xf]
        %v433 = vld [vmem:[#allocation11 + $0xc] sm:$0xf]
        %v434 = vld [vmem:[#allocation11 + $0x10] sm:$0xf]
        %v435 = vld [vmem:[#allocation11 + $0x14] sm:$0xf]
        %v436 = vld [vmem:[#allocation11 + $0x18] sm:$0xf]
        %v437 = vld [vmem:[#allocation11 + $0x1c] sm:$0xf]
        %v446 = vunpack.c.l.b16 %v430
        %v447 = vunpack.c.l.b16 %v431
        %v448 = vunpack.c.l.b16 %v432
        %v449 = vunpack.c.l.b16 %v433
        %v450 = vunpack.c.l.b16 %v434
        %v451 = vunpack.c.l.b16 %v435
        %v452 = vunpack.c.l.b16 %v436
        %v453 = vunpack.c.l.b16 %v437
        %v454 = vpack.c.b16 %v447, %v446
        %v455 = vpack.c.b16 %v449, %v448
        %v456 = vpack.c.b16 %v451, %v450
        %v457 = vpack.c.b16 %v453, %v452
        %462 = vmatprep.subr.bf16.mxu0 0
        %463 = vmatpush1.bf16.msra.mxu0 %v454
        %464 = vmatprep.subr.bf16.mxu0 0
        %465 = vmatpush1.bf16.msra.mxu0 %v455
        %466 = vmatprep.subr.bf16.mxu0 0
        %467 = vmatpush1.bf16.msra.mxu0 %v456
        %468 = vmatprep.subr.bf16.mxu0 0
        %469 = vmatpush1.bf16.msra.mxu0 %v457
        %470 = vmatprep.subr.bf16.mxu0 0
        %471 = vmatpush1.bf16.msra.mxu0 0
        %472 = vmatprep.subr.bf16.mxu0 0
        %473 = vmatpush1.bf16.msra.mxu0 0
        %474 = vmatprep.subr.bf16.mxu0 0
        %475 = vmatpush1.bf16.msra.mxu0 0
        %476 = vmatprep.subr.bf16.mxu0 0
        %477 = vmatpush1.bf16.msra.mxu0 0
        %478 = vmatprep.subr.bf16.mxu0 0
        %479 = vmatpush1.bf16.msra.mxu0 0
        %480 = vmatprep.subr.bf16.mxu0 0
        %481 = vmatpush1.bf16.msra.mxu0 0
        %482 = vmatprep.subr.bf16.mxu0 0
        %483 = vmatpush1.bf16.msra.mxu0 0
        %484 = vmatprep.subr.bf16.mxu0 0
        %485 = vmatpush1.bf16.msra.mxu0 0
        %486 = vmatprep.subr.bf16.mxu0 0
        %487 = vmatpush1.bf16.msra.mxu0 0
        %488 = vmatprep.subr.bf16.mxu0 0
        %489 = vmatpush1.bf16.msra.mxu0 0
        %490 = vmatprep.subr.bf16.mxu0 0
        %491 = vmatpush1.bf16.msra.mxu0 0
        %492 = vmatprep.subr.bf16.mxu0 0
        %493 = vmatpush1.bf16.msra.mxu0 0
        %494 = vmatprep.mubr.bf16.mxu0 0
        %495 = vmatmul.mubr.bf16.gmra.mrb[0].mxu0 %v387
        %v496 = vpop.f32.mrb[0].mxu0
        %v497 = vadd.f32 0.0, %v496
        %v498 = vpop.f32.mrb[0].mxu0
        %v499 = vpop.f32.mrb[0].mxu0
        %v500 = vadd.f32 0.0, %v499
        %v501 = vpop.f32.mrb[0].mxu0
        %502 = vdwg.mxu0
        %v503 = vsub.f32 0.0, %v497
        %v504 = vsub.f32 0.0, %v500
        %v505 = vld [vmem:[#allocation7] sm:$0xff]
        %v506 = vld [vmem:[#allocation7 + $0x8] sm:$0xff]
        %v507 = vld [vmem:[#allocation8] sm:$0xff]
        %v508 = vld [vmem:[#allocation8 + $0x8] sm:$0xff]
        %v509 = vmul.f32 %v424, %v505
        %v510 = vmul.f32 %v427, %v506
        %v511 = vmul.f32 %v503, %v507
        %v512 = vmul.f32 %v504, %v508
        %v513 = vsub.f32 %v509, %v511
        %v514 = vsub.f32 %v510, %v512
        %v515 = vmul.f32 %v424, %v507
        %v516 = vmul.f32 %v427, %v508
        %v517 = vmul.f32 %v503, %v505
        %v518 = vmul.f32 %v504, %v506
        %v519 = vadd.f32 %v515, %v517
        %v520 = vadd.f32 %v516, %v518
        %v521 = vadd.f32 %v513, 1.1920929e-07
        %v522 = vadd.f32 %v514, 1.1920929e-07
        %v523 = vmul.f32 %v521, %v521
        %v524 = vmul.f32 %v522, %v522
        %v525 = vmul.f32 %v519, %v519
        %v526 = vmul.f32 %v520, %v520
        %v527 = vadd.f32 %v523, %v525
        %v528 = vadd.f32 %v524, %v526
        %v529 = vrsqrt.pop %v527
        %v530 = vmul.f32 %v527, %v529
        %vm531 = vcmp.eq.f32.partialorder %v527, inf
        %v532 = vsel %vm531, %v527, %v530
        %vm533 = vcmp.eq.f32.partialorder %v527, 0.0
        %v534 = vand.u32 %v527, 2147483648
        %v535 = vsel %vm533, %v534, %v532
        %v536 = vrsqrt.pop %v528
        %v537 = vmul.f32 %v528, %v536
        %vm538 = vcmp.eq.f32.partialorder %v528, inf
        %v539 = vsel %vm538, %v528, %v537
        %vm540 = vcmp.eq.f32.partialorder %v528, 0.0
        %v541 = vand.u32 %v528, 2147483648
        %v542 = vsel %vm540, %v541, %v539
        %545 = vrot.lane.b32.xlu0 %v519, 64
        %v546 = vpop.permute.xlu0 %545
        %547 = vrot.lane.b32.xlu0 %v520, 64
        %v548 = vpop.permute.xlu0 %547
        %v551 = vsel %vm385, %v513, %v546
        %v552 = vsel %vm385, %v514, %v548
        %553 = vst [vmem:[%s342] sm:$0xff] %v551
        %554 = vst.msk [vmem:[%s342 + $0x8] sm:$0xff] %vm385, %v535
        %555 = vst [vmem:[%s342 + $0x10] sm:$0xff] %v552
        %556 = vst.msk [vmem:[%s342 + $0x18] sm:$0xff] %vm385, %v542
        %s557 = sand.u32 %s165, 1
        %s558 = scalar_lea.sflag [#allocation4], %s557
        %s559 = sand.u32 %s165, 1
        %s560 = smul.addr %s559, 32
        %s561 = scalar_lea.vmem [#allocation13], %s560
        // Predicated region
        $region69: #{tpu_custom_call.1} parent=43 // pred_check
          %p562 = pneg %p175
        $region70: #{tpu_custom_call.1} parent=43 // pred_check_branch
          %564 = sbr.rel (%p562) target = $region72
        $region71: #{tpu_custom_call.1} parent=43 // pred_region
          %s565 = smul.u32 2, %s26
          %s567 = ssub.s32 512, 512
          %568 = vsyncadd %s558, %s567
          %s569 = smul.addr %s565, 2
          %s570 = smul.addr %s569, 128
          %s571 = scalar_lea.hbm %s6, %s570
          %s572 = sshll.u32 %s561, 4
          %s573 = int_to_ptr.vmem [resolvable:$true] %s572
          %578 = dma.vmem_to_hbm [thread:$0]  %s573, 512, %s571, %s558, 256, 256, 16
        $region72: #{tpu_custom_call.1} parent=43 // pred_fallthru
          _
      $region44: #{tpu_custom_call.1} parent=5 // pred_fallthru
        _
      %p579 = scmp.le.s32.totalorder 2, %s21
      // Predicated region
      $region73: #{tpu_custom_call.1} parent=5 // pred_check
        %p580 = pneg %p579
      $region74: #{tpu_custom_call.1} parent=5 // pred_check_branch
        %582 = sbr.rel (%p580) target = $region76
      $region75: #{tpu_custom_call.1} parent=5 // pred_region
        %s583 = ssub.s32 %s21, 2
        // Predicated region
        $region77: #{tpu_custom_call.1} parent=75 // pred_check
          %p584 = pneg %p181
        $region78: #{tpu_custom_call.1} parent=75 // pred_check_branch
          %586 = sbr.rel (%p584) target = $region80
        $region79: #{tpu_custom_call.1} parent=75 // pred_region
          %s587 = sand.u32 %s166, 1
          %s588 = scalar_lea.sflag [#allocation4], %s587
          %s589 = sand.u32 %s166, 1
          %s590 = smul.addr %s589, 32
          %s591 = scalar_lea.vmem [#allocation13], %s590
          %592 = dma.done %s588, 512
        $region80: #{tpu_custom_call.1} parent=75 // pred_fallthru
          _
      $region76: #{tpu_custom_call.1} parent=5 // pred_fallthru
        _
    $region6: #{tpu_custom_call.1} parent=1 // loop_footer
      %s25 = sadd.s32 1, %s21
    $region7: #{tpu_custom_call.1} parent=1 // loop_footer_branch
      %20 = sbr.rel target = $region3
    $region8: #{tpu_custom_call.1} parent=1 // loop_exit
      _
    %593 = vsyncpa [#allocation3], 1
    %s594 = scalar_lea.sflag [#allocation3], 1
    %595 = vsyncpa %s594, 1
    %596 = vsyncpa [#allocation6], 1
    %597 = vsyncpa [#allocation9], 1
    %598 = vsyncpa [#allocation12], 1
    %599 = vsyncpa [#allocation4], 1
    %s600 = scalar_lea.sflag [#allocation4], 1
    %601 = vsyncpa %s600, 1

</llo_original>
